<compile_context>
chip_gen: v6e
topology: v6e:2x2x1
jax: 0.10.0
libtpu: 0.0.40
codegen_flags: <defaults>
</compile_context>

<pallas_src>
import numpy as np

import jax
import jax.numpy as jnp
from jax.experimental import pallas as pl
from jax.experimental.pallas import tpu as pltpu


EPS = 1e-7


# ---------------------------------------------------------------------------
# Host-side distance transform (mirrors the reference's cv2 / CPU / no_grad
# path, which is outside the autograd graph).
# TODO(synk): cv2.distanceTransform (exact Euclidean distance transform) has no
# clean Pallas equivalent; it is computed on host in numpy exactly like the
# reference computes it on CPU under torch.no_grad().
# ---------------------------------------------------------------------------
def _edt(mask):
    """Exact L2 distance from every pixel to the nearest zero pixel."""
    h, w = mask.shape
    zeros = np.argwhere(mask == 0)
    if zeros.size == 0:
        return np.zeros((h, w), np.float32)
    yy, xx = np.meshgrid(np.arange(h), np.arange(w), indexing="ij")
    pts = np.stack([yy.ravel(), xx.ravel()], axis=1).astype(np.float32)
    d2 = ((pts[:, None, :] - zeros[None, :, :].astype(np.float32)) ** 2).sum(-1)
    return np.sqrt(d2.min(axis=1)).reshape(h, w).astype(np.float32)


def get_dist(label):
    """numpy port of DistPenDiceLoss.get_dist.

    Note: the reference loops over all (i, j) but only the values from the
    last iteration survive into `res`, so only label[-1, -1] is used.
    """
    posmask = label.astype(np.uint8)
    negmask = 1 - posmask
    pm = posmask[-1, -1]
    nm = negmask[-1, -1]

    pos_edt = _edt(pm)
    pos_edt = 1.0 - (pos_edt - pos_edt.min()) / (pos_edt.max() - pos_edt.min() + EPS)
    pos_edt = pos_edt * pm

    neg_edt = _edt(nm)
    neg_edt = 1.0 - (neg_edt - neg_edt.min()) / (neg_edt.max() - neg_edt.min() + EPS)
    neg_edt = neg_edt * nm

    return (neg_edt + pos_edt).astype(np.float32)


# ---------------------------------------------------------------------------
# Pallas kernel: streaming reduction over the lane (pixel) axis, all heads in
# one pass so target / dist are read from HBM once.
# ---------------------------------------------------------------------------
def _make_dpd_kernel(tile_n, num_heads, n_total, tiles_per_shard, needs_mask):
    num_slabs = tile_n // 128

    def kernel(t_ref, d_ref, *refs):
        x_refs = refs[:num_heads]
        out_refs = refs[num_heads:]          # [s1_h0, s23_h0, s1_h1, s23_h1, ...]

        i = pl.program_id(1)                 # reduction ("arbitrary") axis, innermost

        @pl.when(i == 0)
        def _():
            for o in out_refs:
                o[...] = jnp.zeros_like(o)

        # Lane-dense (rows, 128) accumulators held in vregs across the slab
        # loop; loaded/stored once per grid step from the VMEM-resident output
        # blocks.  (Re-derive vreg budget if B*C gets large.)
        accs = [o[...] for o in out_refs]

        if needs_mask:
            # Unclamped flat tile index -> absolute lane offset of this block.
            u = pl.program_id(0) * tiles_per_shard + i
            base = u * tile_n
            lane_ids = jax.lax.broadcasted_iota(jnp.int32, (1, 128), 1)

        for k in range(num_slabs):
            sl = slice(k * 128, (k + 1) * 128)
            t = t_ref[:, sl]                 # (rows, 128)
            d = d_ref[:, sl]                 # (1, 128) -> row broadcast
            if needs_mask:
                m = (base + k * 128 + lane_ids) < n_total
                t = jnp.where(m, t, 0.0)
                d = jnp.where(m, d, 0.0)
            for h in range(num_heads):
                x = x_refs[h][:, sl]         # (rows, 128)
                if needs_mask:
                    x = jnp.where(m, x, 0.0)
                tx = t * x
                accs[2 * h] = accs[2 * h] + tx
                # dist*(1-t)*x + dist*(1-x)*t == dist * (x + t - 2*t*x)
                accs[2 * h + 1] = accs[2 * h + 1] + d * (x + t - 2.0 * tx)

        for o, a in zip(out_refs, accs):
            o[...] = a

    return kernel


def _pick_tile_n(n, r, num_heads, tile_n):
    if tile_n is None:
        # ~2 MiB of fresh input per grid step (x heads + target), capped so the
        # unrolled slab loop stays reasonable.  Sweep for production shapes.
        budget = 2 << 20
        tile_n = budget // max((num_heads + 1) * r * 4, 1)
        tile_n = max(512, min(8192, tile_n))
    tile_n = max(128, (int(tile_n) // 128) * 128)
    tile_n = min(tile_n, pl.cdiv(n, 128) * 128)
    return tile_n


def _dist_pen_dice_multi(x_list, target, dist, *, tile_n=None, num_shards=2):
    """Per-head DistPenDice losses for all heads in one HBM pass, given dist."""
    b, c, h, w = target.shape
    r, n = b * c, h * w
    num_heads = len(x_list)

    # Free, contiguous reshape (no transpose): rows = B*C, lanes = H*W.
    t2 = target.reshape(r, n).astype(jnp.float32)
    d2 = dist.reshape(1, n).astype(jnp.float32)
    xs = []
    for x in x_list:
        assert x.shape == target.shape
        xs.append(x.reshape(r, n).astype(jnp.float32))

    tile_n = _pick_tile_n(n, r, num_heads, tile_n)
    tiles = pl.cdiv(n, tile_n)
    num_shards = max(1, min(int(num_shards), tiles))
    tiles_per_shard = pl.cdiv(tiles, num_shards)
    covered = num_shards * tiles_per_shard * tile_n
    needs_mask = covered != n  # remainder lanes and/or duplicate shard tiles

    if needs_mask:
        # Clamp duplicate tiles onto the last real tile (their contribution is
        # masked to zero in-kernel); the last real tile may over-read past n,
        # which Pallas pads with unspecified values that the mask zeroes.
        def lane_map(s, i):
            return (0, jnp.minimum(s * tiles_per_shard + i, tiles - 1))
    else:
        def lane_map(s, i):
            return (0, s * tiles_per_shard + i)

    out_map = lambda s, i: (s, 0, 0)

    outs = pl.pallas_call(
        _make_dpd_kernel(tile_n, num_heads, n, tiles_per_shard, needs_mask),
        out_shape=[
            jax.ShapeDtypeStruct((num_shards, r, 128), jnp.float32)
            for _ in range(2 * num_heads)
        ],
        grid_spec=pltpu.PrefetchScalarGridSpec(
            num_scalar_prefetch=0,
            grid=(num_shards, tiles_per_shard),
            in_specs=(
                [pl.BlockSpec((r, tile_n), lane_map),    # target  (B*C, N)
                 pl.BlockSpec((1, tile_n), lane_map)]    # dist    (1, N)
                + [pl.BlockSpec((r, tile_n), lane_map)   # one per head
                   for _ in range(num_heads)]
            ),
            out_specs=[
                pl.BlockSpec((None, r, 128), out_map)    # per-shard S1/S23 partials
                for _ in range(2 * num_heads)
            ],
        ),
        compiler_params=pltpu.CompilerParams(
            dimension_semantics=("parallel", "arbitrary"),
        ),
    )(t2, d2, *xs)

    # Tiny finalize in plain JAX: shards + lanes -> per-row, rows -> per-batch.
    losses = []
    for hd in range(num_heads):
        s1_b = outs[2 * hd].sum(axis=(0, 2)).reshape(b, c).sum(axis=1)       # (B,)
        s23_b = outs[2 * hd + 1].sum(axis=(0, 2)).reshape(b, c).sum(axis=1)  # (B,)
        num = 2.0 * s1_b
        den = num + s23_b
        losses.append(jnp.mean(1.0 - num / (den + EPS)))
    return losses


def dist_pen_dice_forward(hyp, pred, score, target):
    """Mirrors DistPenDiceLoss.forward(pred, score, target).

    Note: the `score` argument is unused by the reference forward (it only
    calls self._forward on the entries of `pred`) -- kept for signature parity.
    """
    del score
    if hyp["model"]["num_outputs"] == 1:
        pred = [pred]
    weights = hyp["train"]["loss_balance_weights"]
    assert len(weights) == len(pred)
    # dist depends only on target; the reference recomputes it per head (under
    # no_grad) with an identical result, so compute it once here.
    dist = jnp.asarray(get_dist(np.asarray(target)))
    losses = _dist_pen_dice_multi(list(pred), target, dist)
    return sum(w * l for w, l in zip(weights, losses))


def _reference_forward(hyp, pred, target, dist):
    """Pure-JAX reference of the PyTorch semantics, for validation."""
    if hyp["model"]["num_outputs"] == 1:
        pred = [pred]

    def single(x):
        num = 2.0 * jnp.sum(target * x, axis=(1, 2, 3))
        den = (
            num
            + jnp.sum(dist[None, None] * (1.0 - target) * x, axis=(1, 2, 3))
            + jnp.sum(dist[None, None] * (1.0 - x) * target, axis=(1, 2, 3))
        )
        return jnp.mean(1.0 - num / (den + EPS))

    weights = hyp["train"]["loss_balance_weights"]
    return sum(w * single(x) for w, x in zip(weights, pred))


if __name__ == "__main__":
    # ---------------- Test 1: reference config (lane count divides tiles) ----
    hyp = {
        "model": {"num_outputs": 2},
        "train": {"loss_balance_weights": [0.4, 1.0]},
    }

    key = jax.random.PRNGKey(0)
    B, C, H, W = 2, 4, 16, 16
    k1, k2, k3, k4, k5, k6 = jax.random.split(key, 6)

    pred0 = jax.nn.sigmoid(jax.random.normal(k1, (B, C, H, W), jnp.float32))
    pred1 = jax.nn.sigmoid(jax.random.normal(k2, (B, C, H, W), jnp.float32))
    preds = [pred0, pred1]

    labels = jax.random.randint(k3, (B, H, W), 0, C)
    target = jax.nn.one_hot(labels, C, axis=1, dtype=jnp.float32)  # (B, C, H, W)

    dummy_score = pred0  # unused by the reference forward
    loss = dist_pen_dice_forward(hyp, preds, dummy_score, target)
    loss = jax.block_until_ready(loss)

    dist = jnp.asarray(get_dist(np.asarray(target)))
    ref = jax.block_until_ready(_reference_forward(hyp, preds, target, dist))
    assert jnp.allclose(loss, ref, rtol=1e-5, atol=1e-6), (loss, ref)

    # ---------------- Test 2: exercise mask + uneven-shard path --------------
    hyp2 = {
        "model": {"num_outputs": 2},
        "train": {"loss_balance_weights": [1.0, 0.5]},
    }
    B2, C2, H2, W2 = 2, 3, 16, 20  # H*W = 320: not a multiple of the 128-lane tile
    q0 = jax.nn.sigmoid(jax.random.normal(k4, (B2, C2, H2, W2), jnp.float32))
    q1 = jax.nn.sigmoid(jax.random.normal(k5, (B2, C2, H2, W2), jnp.float32))
    labels2 = jax.random.randint(k6, (B2, H2, W2), 0, C2)
    target2 = jax.nn.one_hot(labels2, C2, axis=1, dtype=jnp.float32)
    dist2 = jnp.asarray(get_dist(np.asarray(target2)))

    # Small explicit tile so tiles=3 across 2 "parallel" shards (one duplicate,
    # masked) plus a partially out-of-bounds last tile (masked remainder).
    l2a, l2b = _dist_pen_dice_multi([q0, q1], target2, dist2, tile_n=128, num_shards=2)
    loss2 = jax.block_until_ready(1.0 * l2a + 0.5 * l2b)
    ref2 = jax.block_until_ready(_reference_forward(hyp2, [q0, q1], target2, dist2))
    assert jnp.allclose(loss2, ref2, rtol=1e-5, atol=1e-6), (loss2, ref2)

    print("KERNEL_OK")
</pallas_src>

<mosaic_0001>
module attributes {stable_mosaic.version = 11 : i64} {
  func.func @kernel(%arg0: i32, %arg1: i32, %arg2: memref<8x256xf32, #tpu.memory_space<vmem>>, %arg3: memref<1x256xf32, #tpu.memory_space<vmem>>, %arg4: memref<8x256xf32, #tpu.memory_space<vmem>>, %arg5: memref<8x256xf32, #tpu.memory_space<vmem>>, %arg6: memref<1x8x128xf32, #tpu.memory_space<vmem>>, %arg7: memref<1x8x128xf32, #tpu.memory_space<vmem>>, %arg8: memref<1x8x128xf32, #tpu.memory_space<vmem>>, %arg9: memref<1x8x128xf32, #tpu.memory_space<vmem>>) attributes {dimension_semantics = [#tpu.dimension_semantics<parallel>, #tpu.dimension_semantics<arbitrary>], iteration_bounds = array<i64: 1, 1>, scalar_prefetch = 0 : i64, scratch_operands = 0 : i64, tpu.core_type = #tpu.core_type<tc>, window_params = [{transform_indices = @transform_0, window_bounds = array<i64: 8, 256>}, {transform_indices = @transform_1, window_bounds = array<i64: 1, 256>}, {transform_indices = @transform_2, window_bounds = array<i64: 8, 256>}, {transform_indices = @transform_3, window_bounds = array<i64: 8, 256>}, {transform_indices = @transform_4, window_bounds = array<i64: 1, 8, 128>}, {transform_indices = @transform_5, window_bounds = array<i64: 1, 8, 128>}, {transform_indices = @transform_6, window_bounds = array<i64: 1, 8, 128>}, {transform_indices = @transform_7, window_bounds = array<i64: 1, 8, 128>}]} {
    %c0_i32 = arith.constant 0 : i32
    %0 = arith.cmpi eq, %arg1, %c0_i32 : i32
    %1 = arith.extui %0 : i1 to i32
    %c0_i32_0 = arith.constant 0 : i32
    %2 = arith.cmpi ne, %1, %c0_i32_0 : i32
    scf.if %2 {
      %cst_42 = arith.constant 0.000000e+00 : f32
      %67 = vector.broadcast %cst_42 : f32 to vector<8x128xf32>
      %c0_43 = arith.constant 0 : index
      %c0_44 = arith.constant 0 : index
      %c0_45 = arith.constant 0 : index
      %68 = vector.load %arg6[%c0_43, %c0_44, %c0_45] : memref<1x8x128xf32, #tpu.memory_space<vmem>>, vector<1x8x128xf32>
      %69 = vector.shape_cast %68 : vector<1x8x128xf32> to vector<8x128xf32>
      %70 = vector.shape_cast %67 : vector<8x128xf32> to vector<1x8x128xf32>
      tpu.vector_store %arg6[%c0_43, %c0_44, %c0_45], %70 {strides = array<i32>} : memref<1x8x128xf32, #tpu.memory_space<vmem>>, vector<1x8x128xf32>,
      %cst_46 = arith.constant 0.000000e+00 : f32
      %71 = vector.broadcast %cst_46 : f32 to vector<8x128xf32>
      %c0_47 = arith.constant 0 : index
      %c0_48 = arith.constant 0 : index
      %c0_49 = arith.constant 0 : index
      %72 = vector.load %arg7[%c0_47, %c0_48, %c0_49] : memref<1x8x128xf32, #tpu.memory_space<vmem>>, vector<1x8x128xf32>
      %73 = vector.shape_cast %72 : vector<1x8x128xf32> to vector<8x128xf32>
      %74 = vector.shape_cast %71 : vector<8x128xf32> to vector<1x8x128xf32>
      tpu.vector_store %arg7[%c0_47, %c0_48, %c0_49], %74 {strides = array<i32>} : memref<1x8x128xf32, #tpu.memory_space<vmem>>, vector<1x8x128xf32>,
      %cst_50 = arith.constant 0.000000e+00 : f32
      %75 = vector.broadcast %cst_50 : f32 to vector<8x128xf32>
      %c0_51 = arith.constant 0 : index
      %c0_52 = arith.constant 0 : index
      %c0_53 = arith.constant 0 : index
      %76 = vector.load %arg8[%c0_51, %c0_52, %c0_53] : memref<1x8x128xf32, #tpu.memory_space<vmem>>, vector<1x8x128xf32>
      %77 = vector.shape_cast %76 : vector<1x8x128xf32> to vector<8x128xf32>
      %78 = vector.shape_cast %75 : vector<8x128xf32> to vector<1x8x128xf32>
      tpu.vector_store %arg8[%c0_51, %c0_52, %c0_53], %78 {strides = array<i32>} : memref<1x8x128xf32, #tpu.memory_space<vmem>>, vector<1x8x128xf32>,
      %cst_54 = arith.constant 0.000000e+00 : f32
      %79 = vector.broadcast %cst_54 : f32 to vector<8x128xf32>
      %c0_55 = arith.constant 0 : index
      %c0_56 = arith.constant 0 : index
      %c0_57 = arith.constant 0 : index
      %80 = vector.load %arg9[%c0_55, %c0_56, %c0_57] : memref<1x8x128xf32, #tpu.memory_space<vmem>>, vector<1x8x128xf32>
      %81 = vector.shape_cast %80 : vector<1x8x128xf32> to vector<8x128xf32>
      %82 = vector.shape_cast %79 : vector<8x128xf32> to vector<1x8x128xf32>
      tpu.vector_store %arg9[%c0_55, %c0_56, %c0_57], %82 {strides = array<i32>} : memref<1x8x128xf32, #tpu.memory_space<vmem>>, vector<1x8x128xf32>,
    } else {
    }
    %c0 = arith.constant 0 : index
    %c0_1 = arith.constant 0 : index
    %c0_2 = arith.constant 0 : index
    %3 = vector.load %arg6[%c0, %c0_1, %c0_2] : memref<1x8x128xf32, #tpu.memory_space<vmem>>, vector<1x8x128xf32>
    %4 = vector.shape_cast %3 : vector<1x8x128xf32> to vector<8x128xf32>
    %c0_3 = arith.constant 0 : index
    %c0_4 = arith.constant 0 : index
    %c0_5 = arith.constant 0 : index
    %5 = vector.load %arg7[%c0_3, %c0_4, %c0_5] : memref<1x8x128xf32, #tpu.memory_space<vmem>>, vector<1x8x128xf32>
    %6 = vector.shape_cast %5 : vector<1x8x128xf32> to vector<8x128xf32>
    %c0_6 = arith.constant 0 : index
    %c0_7 = arith.constant 0 : index
    %c0_8 = arith.constant 0 : index
    %7 = vector.load %arg8[%c0_6, %c0_7, %c0_8] : memref<1x8x128xf32, #tpu.memory_space<vmem>>, vector<1x8x128xf32>
    %8 = vector.shape_cast %7 : vector<1x8x128xf32> to vector<8x128xf32>
    %c0_9 = arith.constant 0 : index
    %c0_10 = arith.constant 0 : index
    %c0_11 = arith.constant 0 : index
    %9 = vector.load %arg9[%c0_9, %c0_10, %c0_11] : memref<1x8x128xf32, #tpu.memory_space<vmem>>, vector<1x8x128xf32>
    %10 = vector.shape_cast %9 : vector<1x8x128xf32> to vector<8x128xf32>
    %c0_12 = arith.constant 0 : index
    %c0_13 = arith.constant 0 : index
    %11 = vector.load %arg2[%c0_12, %c0_13] : memref<8x256xf32, #tpu.memory_space<vmem>>, vector<8x128xf32>
    %c0_14 = arith.constant 0 : index
    %c0_15 = arith.constant 0 : index
    %12 = vector.load %arg3[%c0_14, %c0_15] : memref<1x256xf32, #tpu.memory_space<vmem>>, vector<1x128xf32>
    %c0_16 = arith.constant 0 : index
    %c0_17 = arith.constant 0 : index
    %13 = vector.load %arg4[%c0_16, %c0_17] : memref<8x256xf32, #tpu.memory_space<vmem>>, vector<8x128xf32>
    %14 = arith.mulf %11, %13 : vector<8x128xf32>
    %15 = arith.addf %4, %14 : vector<8x128xf32>
    %16 = arith.addf %13, %11 : vector<8x128xf32>
    %cst = arith.constant 2.000000e+00 : f32
    %17 = vector.broadcast %cst : f32 to vector<8x128xf32>
    %18 = arith.mulf %17, %14 : vector<8x128xf32>
    %19 = arith.subf %16, %18 : vector<8x128xf32>
    %20 = vector.broadcast %12 : vector<1x128xf32> to vector<8x128xf32>
    %21 = arith.mulf %20, %19 : vector<8x128xf32>
    %22 = arith.addf %6, %21 : vector<8x128xf32>
    %c0_18 = arith.constant 0 : index
    %c0_19 = arith.constant 0 : index
    %23 = vector.load %arg5[%c0_18, %c0_19] : memref<8x256xf32, #tpu.memory_space<vmem>>, vector<8x128xf32>
    %24 = arith.mulf %11, %23 : vector<8x128xf32>
    %25 = arith.addf %8, %24 : vector<8x128xf32>
    %26 = arith.addf %23, %11 : vector<8x128xf32>
    %cst_20 = arith.constant 2.000000e+00 : f32
    %27 = vector.broadcast %cst_20 : f32 to vector<8x128xf32>
    %28 = arith.mulf %27, %24 : vector<8x128xf32>
    %29 = arith.subf %26, %28 : vector<8x128xf32>
    %30 = vector.broadcast %12 : vector<1x128xf32> to vector<8x128xf32>
    %31 = arith.mulf %30, %29 : vector<8x128xf32>
    %32 = arith.addf %10, %31 : vector<8x128xf32>
    %c0_21 = arith.constant 0 : index
    %c128 = arith.constant 128 : index
    %33 = vector.load %arg2[%c0_21, %c128] : memref<8x256xf32, #tpu.memory_space<vmem>>, vector<8x128xf32>
    %c0_22 = arith.constant 0 : index
    %c128_23 = arith.constant 128 : index
    %34 = vector.load %arg3[%c0_22, %c128_23] : memref<1x256xf32, #tpu.memory_space<vmem>>, vector<1x128xf32>
    %c0_24 = arith.constant 0 : index
    %c128_25 = arith.constant 128 : index
    %35 = vector.load %arg4[%c0_24, %c128_25] : memref<8x256xf32, #tpu.memory_space<vmem>>, vector<8x128xf32>
    %36 = arith.mulf %33, %35 : vector<8x128xf32>
    %37 = arith.addf %15, %36 : vector<8x128xf32>
    %38 = arith.addf %35, %33 : vector<8x128xf32>
    %cst_26 = arith.constant 2.000000e+00 : f32
    %39 = vector.broadcast %cst_26 : f32 to vector<8x128xf32>
    %40 = arith.mulf %39, %36 : vector<8x128xf32>
    %41 = arith.subf %38, %40 : vector<8x128xf32>
    %42 = vector.broadcast %34 : vector<1x128xf32> to vector<8x128xf32>
    %43 = arith.mulf %42, %41 : vector<8x128xf32>
    %44 = arith.addf %22, %43 : vector<8x128xf32>
    %c0_27 = arith.constant 0 : index
    %c128_28 = arith.constant 128 : index
    %45 = vector.load %arg5[%c0_27, %c128_28] : memref<8x256xf32, #tpu.memory_space<vmem>>, vector<8x128xf32>
    %46 = arith.mulf %33, %45 : vector<8x128xf32>
    %47 = arith.addf %25, %46 : vector<8x128xf32>
    %48 = arith.addf %45, %33 : vector<8x128xf32>
    %cst_29 = arith.constant 2.000000e+00 : f32
    %49 = vector.broadcast %cst_29 : f32 to vector<8x128xf32>
    %50 = arith.mulf %49, %46 : vector<8x128xf32>
    %51 = arith.subf %48, %50 : vector<8x128xf32>
    %52 = vector.broadcast %34 : vector<1x128xf32> to vector<8x128xf32>
    %53 = arith.mulf %52, %51 : vector<8x128xf32>
    %54 = arith.addf %32, %53 : vector<8x128xf32>
    %c0_30 = arith.constant 0 : index
    %c0_31 = arith.constant 0 : index
    %c0_32 = arith.constant 0 : index
    %55 = vector.load %arg6[%c0_30, %c0_31, %c0_32] : memref<1x8x128xf32, #tpu.memory_space<vmem>>, vector<1x8x128xf32>
    %56 = vector.shape_cast %55 : vector<1x8x128xf32> to vector<8x128xf32>
    %57 = vector.shape_cast %37 : vector<8x128xf32> to vector<1x8x128xf32>
    tpu.vector_store %arg6[%c0_30, %c0_31, %c0_32], %57 {strides = array<i32>} : memref<1x8x128xf32, #tpu.memory_space<vmem>>, vector<1x8x128xf32>,
    %c0_33 = arith.constant 0 : index
    %c0_34 = arith.constant 0 : index
    %c0_35 = arith.constant 0 : index
    %58 = vector.load %arg7[%c0_33, %c0_34, %c0_35] : memref<1x8x128xf32, #tpu.memory_space<vmem>>, vector<1x8x128xf32>
    %59 = vector.shape_cast %58 : vector<1x8x128xf32> to vector<8x128xf32>
    %60 = vector.shape_cast %44 : vector<8x128xf32> to vector<1x8x128xf32>
    tpu.vector_store %arg7[%c0_33, %c0_34, %c0_35], %60 {strides = array<i32>} : memref<1x8x128xf32, #tpu.memory_space<vmem>>, vector<1x8x128xf32>,
    %c0_36 = arith.constant 0 : index
    %c0_37 = arith.constant 0 : index
    %c0_38 = arith.constant 0 : index
    %61 = vector.load %arg8[%c0_36, %c0_37, %c0_38] : memref<1x8x128xf32, #tpu.memory_space<vmem>>, vector<1x8x128xf32>
    %62 = vector.shape_cast %61 : vector<1x8x128xf32> to vector<8x128xf32>
    %63 = vector.shape_cast %47 : vector<8x128xf32> to vector<1x8x128xf32>
    tpu.vector_store %arg8[%c0_36, %c0_37, %c0_38], %63 {strides = array<i32>} : memref<1x8x128xf32, #tpu.memory_space<vmem>>, vector<1x8x128xf32>,
    %c0_39 = arith.constant 0 : index
    %c0_40 = arith.constant 0 : index
    %c0_41 = arith.constant 0 : index
    %64 = vector.load %arg9[%c0_39, %c0_40, %c0_41] : memref<1x8x128xf32, #tpu.memory_space<vmem>>, vector<1x8x128xf32>
    %65 = vector.shape_cast %64 : vector<1x8x128xf32> to vector<8x128xf32>
    %66 = vector.shape_cast %54 : vector<8x128xf32> to vector<1x8x128xf32>
    tpu.vector_store %arg9[%c0_39, %c0_40, %c0_41], %66 {strides = array<i32>} : memref<1x8x128xf32, #tpu.memory_space<vmem>>, vector<1x8x128xf32>,
    return
  }
  func.func @transform_0(%arg0: i32, %arg1: i32) -> (i32, i32) {
    %c1_i32 = arith.constant 1 : i32
    %0 = arith.muli %arg0, %c1_i32 : i32
    %1 = arith.addi %0, %arg1 : i32
    %c0_i32 = arith.constant 0 : i32
    %c0_i32_0 = arith.constant 0 : i32
    return %c0_i32, %1 : i32, i32
  }
  func.func @transform_1(%arg0: i32, %arg1: i32) -> (i32, i32) {
    %c1_i32 = arith.constant 1 : i32
    %0 = arith.muli %arg0, %c1_i32 : i32
    %1 = arith.addi %0, %arg1 : i32
    %c0_i32 = arith.constant 0 : i32
    %c0_i32_0 = arith.constant 0 : i32
    return %c0_i32, %1 : i32, i32
  }
  func.func @transform_2(%arg0: i32, %arg1: i32) -> (i32, i32) {
    %c1_i32 = arith.constant 1 : i32
    %0 = arith.muli %arg0, %c1_i32 : i32
    %1 = arith.addi %0, %arg1 : i32
    %c0_i32 = arith.constant 0 : i32
    %c0_i32_0 = arith.constant 0 : i32
    return %c0_i32, %1 : i32, i32
  }
  func.func @transform_3(%arg0: i32, %arg1: i32) -> (i32, i32) {
    %c1_i32 = arith.constant 1 : i32
    %0 = arith.muli %arg0, %c1_i32 : i32
    %1 = arith.addi %0, %arg1 : i32
    %c0_i32 = arith.constant 0 : i32
    %c0_i32_0 = arith.constant 0 : i32
    return %c0_i32, %1 : i32, i32
  }
  func.func @transform_4(%arg0: i32, %arg1: i32) -> (i32, i32, i32) {
    %c0_i32 = arith.constant 0 : i32
    %c0_i32_0 = arith.constant 0 : i32
    %c0_i32_1 = arith.constant 0 : i32
    return %arg0, %c0_i32, %c0_i32_0 : i32, i32, i32
  }
  func.func @transform_5(%arg0: i32, %arg1: i32) -> (i32, i32, i32) {
    %c0_i32 = arith.constant 0 : i32
    %c0_i32_0 = arith.constant 0 : i32
    %c0_i32_1 = arith.constant 0 : i32
    return %arg0, %c0_i32, %c0_i32_0 : i32, i32, i32
  }
  func.func @transform_6(%arg0: i32, %arg1: i32) -> (i32, i32, i32) {
    %c0_i32 = arith.constant 0 : i32
    %c0_i32_0 = arith.constant 0 : i32
    %c0_i32_1 = arith.constant 0 : i32
    return %arg0, %c0_i32, %c0_i32_0 : i32, i32, i32
  }
  func.func @transform_7(%arg0: i32, %arg1: i32) -> (i32, i32, i32) {
    %c0_i32 = arith.constant 0 : i32
    %c0_i32_0 = arith.constant 0 : i32
    %c0_i32_1 = arith.constant 0 : i32
    return %arg0, %c0_i32, %c0_i32_0 : i32, i32, i32
  }
}

</mosaic_0001>

<llo_original>
// kernel: tpu_custom_call.1
$region0: #{tpu_custom_call.1}
  #allocation0 [shape = 'u32[]', space=smem, size = 0x4, offset = 0x4, fixed_abs, tag = 'smem constant byte address 0x4 - core index']
  #allocation1 [shape = 'u32[144,128]{1,0:T(1,128)}', space=vmem, size = 0x12000, scoped, tag = 'internal scratch']
  %s0 = inlined_call_operand.hbm [shape: f32[8,256], index: 0, kind: input, shape index: {}]
  %s1 = inlined_call_operand.hbm [shape: f32[1,256], index: 1, kind: input, shape index: {}]
  %s2 = inlined_call_operand.hbm [shape: f32[8,256], index: 2, kind: input, shape index: {}]
  %s3 = inlined_call_operand.hbm [shape: f32[8,256], index: 3, kind: input, shape index: {}]
  %s4 = inlined_call_operand.hbm [shape: f32[1,8,128], index: 4, kind: output, shape index: {0}]
  %s5 = inlined_call_operand.hbm [shape: f32[1,8,128], index: 5, kind: output, shape index: {1}]
  %s6 = inlined_call_operand.hbm [shape: f32[1,8,128], index: 6, kind: output, shape index: {2}]
  %s7 = inlined_call_operand.hbm [shape: f32[1,8,128], index: 7, kind: output, shape index: {3}]
  %8 = xla_tuple %s4, %s5, %s6, %s7
  %s9 = sld [smem:[#allocation0]]
  $region70: #{tpu_custom_call.1} parent=0
    _
  %s11 = ssub.s32 1, %s9
  %s12 = scalar_select 0, %s11, %s9
  $region1: #{tpu_custom_call.1} parent=0
    #allocation2 [shape = 'u8[8192]{0}', space=vmem, size = 0x2000, scoped, tag = 'input window, operand 0, single buffered']
    #allocation3 [shape = 's32[1]{0}', space=sflag, size = 0x4, scoped, tag = 'scoped memory for tpu_custom_call.1']
    #allocation4 [shape = 's32[1]{0}', space=sflag, size = 0x4, scoped, tag = 'scoped memory for tpu_custom_call.1']
    #allocation5 [shape = 'u8[1024]{0}', space=vmem, size = 0x400, scoped, tag = 'input window, operand 1, single buffered']
    #allocation6 [shape = 's32[1]{0}', space=sflag, size = 0x4, scoped, tag = 'scoped memory for tpu_custom_call.1']
    #allocation7 [shape = 'u8[8192]{0}', space=vmem, size = 0x2000, scoped, tag = 'input window, operand 2, single buffered']
    #allocation8 [shape = 'u8[8192]{0}', space=vmem, size = 0x2000, scoped, tag = 'input window, operand 3, single buffered']
    #allocation9 [shape = 's32[1]{0}', space=sflag, size = 0x4, scoped, tag = 'scoped memory for tpu_custom_call.1']
    #allocation10 [shape = 'u8[4096]{0}', space=vmem, size = 0x1000, scoped, tag = 'output window, operand 0, single buffered']
    #allocation11 [shape = 'u8[4096]{0}', space=vmem, size = 0x1000, scoped, tag = 'output window, operand 1, single buffered']
    #allocation12 [shape = 's32[1]{0}', space=sflag, size = 0x4, scoped, tag = 'scoped memory for tpu_custom_call.1']
    #allocation13 [shape = 'u8[4096]{0}', space=vmem, size = 0x1000, scoped, tag = 'output window, operand 2, single buffered']
    #allocation14 [shape = 'u8[4096]{0}', space=vmem, size = 0x1000, scoped, tag = 'output window, operand 3, single buffered']
    #allocation15 [shape = 's32[1]{0}', space=sflag, size = 0x4, scoped, tag = 'scoped memory for tpu_custom_call.1']
    %13 = vsyncpa [#allocation3], 0
    %14 = vsyncpa [#allocation6], 0
    %15 = vsyncpa [#allocation9], 0
    %16 = vsyncpa [#allocation4], 0
    %17 = vsyncpa [#allocation12], 0
    %18 = vsyncpa [#allocation15], 0
    // Predicated region
    $region2: #{tpu_custom_call.1} parent=1 // pred_check
      _
    $region3: #{tpu_custom_call.1} parent=1 // pred_check_branch
      %20 = sbr.rel (0) target = $region5
    $region4: #{tpu_custom_call.1} parent=1 // pred_region
      %s21 = sadd.s32 0, 0
      %s22 = smul.u32 2, %s21
      %s24 = ssub.s32 256, 256
      %25 = vsyncadd [#allocation3], %s24
      %s26 = smul.addr %s22, 128
      %s27 = scalar_lea.hbm %s0, %s26
      %s29 = sshll.u32 [#allocation2], 4
      %s30 = int_to_ptr.vmem [resolvable:$true] %s29
      %32 = dma.hbm_to_vmem [thread:$0]  %s27, 256, %s30, [#allocation3]
    $region5: #{tpu_custom_call.1} parent=1 // pred_fallthru
      _
    // Predicated region
    $region6: #{tpu_custom_call.1} parent=1 // pred_check
      _
    $region7: #{tpu_custom_call.1} parent=1 // pred_check_branch
      %34 = sbr.rel (0) target = $region9
    $region8: #{tpu_custom_call.1} parent=1 // pred_region
      %s35 = sadd.s32 0, 0
      %s36 = smul.u32 2, %s35
      %s38 = ssub.s32 32, 32
      %39 = vsyncadd [#allocation6], %s38
      %s40 = smul.addr %s36, 16
      %s41 = scalar_lea.hbm %s1, %s40
      %s43 = sshll.u32 [#allocation5], 4
      %s44 = int_to_ptr.vmem [resolvable:$true] %s43
      %46 = dma.hbm_to_vmem [thread:$0]  %s41, 32, %s44, [#allocation6]
    $region9: #{tpu_custom_call.1} parent=1 // pred_fallthru
      _
    // Predicated region
    $region10: #{tpu_custom_call.1} parent=1 // pred_check
      _
    $region11: #{tpu_custom_call.1} parent=1 // pred_check_branch
      %48 = sbr.rel (0) target = $region13
    $region12: #{tpu_custom_call.1} parent=1 // pred_region
      %s49 = sadd.s32 0, 0
      %s50 = smul.u32 2, %s49
      %s52 = ssub.s32 256, 256
      %53 = vsyncadd [#allocation6], %s52
      %s54 = smul.addr %s50, 128
      %s55 = scalar_lea.hbm %s2, %s54
      %s57 = sshll.u32 [#allocation7], 4
      %s58 = int_to_ptr.vmem [resolvable:$true] %s57
      %60 = dma.hbm_to_vmem [thread:$0]  %s55, 256, %s58, [#allocation6]
    $region13: #{tpu_custom_call.1} parent=1 // pred_fallthru
      _
    // Predicated region
    $region14: #{tpu_custom_call.1} parent=1 // pred_check
      _
    $region15: #{tpu_custom_call.1} parent=1 // pred_check_branch
      %62 = sbr.rel (0) target = $region17
    $region16: #{tpu_custom_call.1} parent=1 // pred_region
      %s63 = sadd.s32 0, 0
      %s64 = smul.u32 2, %s63
      %s66 = ssub.s32 256, 256
      %67 = vsyncadd [#allocation9], %s66
      %s68 = smul.addr %s64, 128
      %s69 = scalar_lea.hbm %s3, %s68
      %s71 = sshll.u32 [#allocation8], 4
      %s72 = int_to_ptr.vmem [resolvable:$true] %s71
      %74 = dma.hbm_to_vmem [thread:$0]  %s69, 256, %s72, [#allocation9]
    $region17: #{tpu_custom_call.1} parent=1 // pred_fallthru
      _
    // Predicated region
    $region18: #{tpu_custom_call.1} parent=1 // pred_check
      _
    $region19: #{tpu_custom_call.1} parent=1 // pred_check_branch
      %76 = sbr.rel (0) target = $region21
    $region20: #{tpu_custom_call.1} parent=1 // pred_region
      %77 = dma.done [#allocation3], 256
    $region21: #{tpu_custom_call.1} parent=1 // pred_fallthru
      _
    // Predicated region
    $region22: #{tpu_custom_call.1} parent=1 // pred_check
      _
    $region23: #{tpu_custom_call.1} parent=1 // pred_check_branch
      %79 = sbr.rel (0) target = $region25
    $region24: #{tpu_custom_call.1} parent=1 // pred_region
      %80 = dma.done [#allocation6], 32
    $region25: #{tpu_custom_call.1} parent=1 // pred_fallthru
      _
    // Predicated region
    $region26: #{tpu_custom_call.1} parent=1 // pred_check
      _
    $region27: #{tpu_custom_call.1} parent=1 // pred_check_branch
      %82 = sbr.rel (0) target = $region29
    $region28: #{tpu_custom_call.1} parent=1 // pred_region
      %83 = dma.done [#allocation6], 256
    $region29: #{tpu_custom_call.1} parent=1 // pred_fallthru
      _
    // Predicated region
    $region30: #{tpu_custom_call.1} parent=1 // pred_check
      _
    $region31: #{tpu_custom_call.1} parent=1 // pred_check_branch
      %85 = sbr.rel (0) target = $region33
    $region32: #{tpu_custom_call.1} parent=1 // pred_region
      %86 = dma.done [#allocation9], 256
    $region33: #{tpu_custom_call.1} parent=1 // pred_fallthru
      _
    %s87 = sadd.s32 0, 0
    %s88 = smul.u32 2, %s87
    %s89 = sadd.s32 0, 0
    %s90 = smul.u32 2, %s89
    %s91 = sadd.s32 0, 0
    %s92 = smul.u32 2, %s91
    %s93 = sadd.s32 0, 0
    %s94 = smul.u32 2, %s93
    %p95 = scmp.eq.s32.totalorder 0, 0
    // Predicated region
    $region34: #{tpu_custom_call.1} parent=1 // pred_check
      %p96 = pneg %p95
    $region35: #{tpu_custom_call.1} parent=1 // pred_check_branch
      %98 = sbr.rel (%p96) target = $region37
    $region36: #{tpu_custom_call.1} parent=1 // pred_region
      %99 = vst [vmem:[#allocation10] sm:$0xff] 0.0
      %100 = vst [vmem:[#allocation11] sm:$0xff] 0.0
      %101 = vst [vmem:[#allocation13] sm:$0xff] 0.0
      %102 = vst [vmem:[#allocation14] sm:$0xff] 0.0
    $region37: #{tpu_custom_call.1} parent=1 // pred_fallthru
      _
    %v103 = vld [vmem:[#allocation10] sm:$0xff]
    %v104 = vld [vmem:[#allocation11] sm:$0xff]
    %v105 = vld [vmem:[#allocation13] sm:$0xff]
    %v106 = vld [vmem:[#allocation14] sm:$0xff]
    %v107 = vld [vmem:[#allocation2] sm:$0xff]
    %v108 = vld [vmem:[#allocation5] sm:$0x1]
    %v109 = vld [vmem:[#allocation7] sm:$0xff]
    %v110 = vmul.f32 %v107, %v109
    %v111 = vadd.f32 %v103, %v110
    %v112 = vadd.f32 %v109, %v107
    %v113 = vmul.f32 %v110, 2.0
    %v114 = vsub.f32 %v112, %v113
    %v116 = vlaneseq
    %v117 = vshrl.u32 %v116, 7
    %v118 = vsub.s32 0, %v117
    %v119 = vrot.slane %v108, %v118
    %v121 = vmul.f32 %v119, %v114
    %v122 = vadd.f32 %v104, %v121
    %v123 = vld [vmem:[#allocation8] sm:$0xff]
    %v124 = vmul.f32 %v107, %v123
    %v125 = vadd.f32 %v105, %v124
    %v126 = vadd.f32 %v123, %v107
    %v127 = vmul.f32 %v124, 2.0
    %v128 = vsub.f32 %v126, %v127
    %v129 = vmul.f32 %v119, %v128
    %v130 = vadd.f32 %v106, %v129
    %v131 = vld [vmem:[#allocation2 + $0x8] sm:$0xff]
    %v132 = vld [vmem:[#allocation5 + $0x1] sm:$0x1]
    %v133 = vld [vmem:[#allocation7 + $0x8] sm:$0xff]
    %v134 = vmul.f32 %v131, %v133
    %v135 = vadd.f32 %v111, %v134
    %v136 = vadd.f32 %v133, %v131
    %v137 = vmul.f32 %v134, 2.0
    %v138 = vsub.f32 %v136, %v137
    %v140 = vlaneseq
    %v141 = vshrl.u32 %v140, 7
    %v142 = vsub.s32 0, %v141
    %v143 = vrot.slane %v132, %v142
    %v145 = vmul.f32 %v143, %v138
    %v146 = vadd.f32 %v122, %v145
    %v147 = vld [vmem:[#allocation8 + $0x8] sm:$0xff]
    %v148 = vmul.f32 %v131, %v147
    %v149 = vadd.f32 %v125, %v148
    %v150 = vadd.f32 %v147, %v131
    %v151 = vmul.f32 %v148, 2.0
    %v152 = vsub.f32 %v150, %v151
    %v153 = vmul.f32 %v143, %v152
    %v154 = vadd.f32 %v130, %v153
    %155 = vst [vmem:[#allocation10] sm:$0xff] %v135
    %156 = vst [vmem:[#allocation11] sm:$0xff] %v146
    %157 = vst [vmem:[#allocation13] sm:$0xff] %v149
    %158 = vst [vmem:[#allocation14] sm:$0xff] %v154
    // Predicated region
    $region38: #{tpu_custom_call.1} parent=1 // pred_check
      _
    $region39: #{tpu_custom_call.1} parent=1 // pred_check_branch
      %160 = sbr.rel (0) target = $region41
    $region40: #{tpu_custom_call.1} parent=1 // pred_region
      %s162 = ssub.s32 128, 128
      %163 = vsyncadd [#allocation4], %s162
      %s165 = sshll.u32 [#allocation10], 4
      %s166 = int_to_ptr.vmem [resolvable:$true] %s165
      %168 = dma.vmem_to_hbm [thread:$0]  %s166, 128, %s4, [#allocation4]
    $region41: #{tpu_custom_call.1} parent=1 // pred_fallthru
      _
    // Predicated region
    $region42: #{tpu_custom_call.1} parent=1 // pred_check
      _
    $region43: #{tpu_custom_call.1} parent=1 // pred_check_branch
      %170 = sbr.rel (0) target = $region45
    $region44: #{tpu_custom_call.1} parent=1 // pred_region
      %s172 = ssub.s32 128, 128
      %173 = vsyncadd [#allocation12], %s172
      %s175 = sshll.u32 [#allocation11], 4
      %s176 = int_to_ptr.vmem [resolvable:$true] %s175
      %178 = dma.vmem_to_hbm [thread:$0]  %s176, 128, %s5, [#allocation12]
    $region45: #{tpu_custom_call.1} parent=1 // pred_fallthru
      _
    // Predicated region
    $region46: #{tpu_custom_call.1} parent=1 // pred_check
      _
    $region47: #{tpu_custom_call.1} parent=1 // pred_check_branch
      %180 = sbr.rel (0) target = $region49
    $region48: #{tpu_custom_call.1} parent=1 // pred_region
      %s182 = ssub.s32 128, 128
      %183 = vsyncadd [#allocation12], %s182
      %s185 = sshll.u32 [#allocation13], 4
      %s186 = int_to_ptr.vmem [resolvable:$true] %s185
      %188 = dma.vmem_to_hbm [thread:$0]  %s186, 128, %s6, [#allocation12]
    $region49: #{tpu_custom_call.1} parent=1 // pred_fallthru
      _
    // Predicated region
    $region50: #{tpu_custom_call.1} parent=1 // pred_check
      _
    $region51: #{tpu_custom_call.1} parent=1 // pred_check_branch
      %190 = sbr.rel (0) target = $region53
    $region52: #{tpu_custom_call.1} parent=1 // pred_region
      %s192 = ssub.s32 128, 128
      %193 = vsyncadd [#allocation15], %s192
      %s195 = sshll.u32 [#allocation14], 4
      %s196 = int_to_ptr.vmem [resolvable:$true] %s195
      %198 = dma.vmem_to_hbm [thread:$0]  %s196, 128, %s7, [#allocation15]
    $region53: #{tpu_custom_call.1} parent=1 // pred_fallthru
      _
    // Predicated region
    $region54: #{tpu_custom_call.1} parent=1 // pred_check
      _
    $region55: #{tpu_custom_call.1} parent=1 // pred_check_branch
      %200 = sbr.rel (0) target = $region57
    $region56: #{tpu_custom_call.1} parent=1 // pred_region
      %201 = dma.done [#allocation4], 128
    $region57: #{tpu_custom_call.1} parent=1 // pred_fallthru
      _
    // Predicated region
    $region58: #{tpu_custom_call.1} parent=1 // pred_check
      _
    $region59: #{tpu_custom_call.1} parent=1 // pred_check_branch
      %203 = sbr.rel (0) target = $region61
    $region60: #{tpu_custom_call.1} parent=1 // pred_region
      %204 = dma.done [#allocation12], 128
    $region61: #{tpu_custom_call.1} parent=1 // pred_fallthru
      _
    // Predicated region
    $region62: #{tpu_custom_call.1} parent=1 // pred_check
      _
    $region63: #{tpu_custom_call.1} parent=1 // pred_check_branch
      %206 = sbr.rel (0) target = $region65
    $region64: #{tpu_custom_call.1} parent=1 // pred_region
      %207 = dma.done [#allocation12], 128
    $region65: #{tpu_custom_call.1} parent=1 // pred_fallthru
      _
    // Predicated region
    $region66: #{tpu_custom_call.1} parent=1 // pred_check
      _
    $region67: #{tpu_custom_call.1} parent=1 // pred_check_branch
      %209 = sbr.rel (0) target = $region69
    $region68: #{tpu_custom_call.1} parent=1 // pred_region
      %210 = dma.done [#allocation15], 128
    $region69: #{tpu_custom_call.1} parent=1 // pred_fallthru
      _
    %211 = vsyncpa [#allocation3], 1
    %212 = vsyncpa [#allocation6], 1
    %213 = vsyncpa [#allocation9], 1
    %214 = vsyncpa [#allocation4], 1
    %215 = vsyncpa [#allocation12], 1
    %216 = vsyncpa [#allocation15], 1

</llo_original>
